<compile_context>
chip_gen: v7x
topology: tpu7x:2x2x1
jax: 0.10.0
libtpu: 0.0.40
codegen_flags: <defaults>
</compile_context>

<pallas_src>
import jax
import jax.numpy as jnp
from jax.experimental import pallas as pl
from jax.experimental.pallas import tpu as pltpu


def _round_up(a: int, b: int) -> int:
    return (a + b - 1) // b * b


def _choose_tm(M: int) -> int:
    """Row-tile size: target 512, but keep >= 2 grid steps for v7x's 2 TCs."""
    target = 512
    if M > 2 * target:
        return target
    tm = _round_up(max(pl.cdiv(M, 2), 1), 8)   # split small M across both cores
    return max(8, min(tm, _round_up(M, 8)))


def _vmem_limit_bytes(tm: int, K: int, E: int, out_bytes: int) -> int:
    """Explicit VMEM budget: double-buffered in/out tiles + resident weight."""
    need = 2 * tm * K * 2            # patches tiles (bf16), double-buffered
    need += 2 * tm * E * out_bytes   # output tiles, double-buffered
    need += 2 * K * E * 2            # bf16 weight (assume 2 buffers, conservative)
    need += 2 * E * 4                # f32 bias
    limit = int(need * 1.5) + (4 << 20)          # slack for compiler internals
    return max(16 << 20, min(limit, 128 << 20))


def _proj_kernel(p_ref, w_ref, b_ref, o_ref):
    # p_ref: (tm, K) bf16   w_ref: (K, E) bf16   b_ref: (1, E) f32
    # o_ref: (tm, E) out dtype.  Minimal epilogue (bias add + cast) -- keep it
    # that way: on v5e the f32 VALU is the second-tightest slot after HBM.
    y = jnp.dot(p_ref[...], w_ref[...], preferred_element_type=jnp.float32)
    o_ref[...] = (y + b_ref[...]).astype(o_ref.dtype)


def patch_embedding(x, proj_weight, proj_bias, cls_token, patch_size,
                    *, tm=None, out_dtype=None):
    """x: (B, C, H, W). proj_weight: (E, K), proj_bias: (E,), cls_token: (1,1,E).

    Returns (B, N + 1, E) with N = (H/p) * (W/p), matching the PyTorch module.
    """
    B, C, H, W = x.shape
    p = patch_size
    assert H % p == 0 and W % p == 0, "image size must be divisible by patch size"
    nH, nW = H // p, W // p
    N = nH * nW
    K = C * p * p
    E = proj_weight.shape[0]
    if out_dtype is None:
        out_dtype = x.dtype

    # nn.Unfold(kernel=p, stride=p) + transpose(1, 2), done in bf16 and flattened
    # to a single M = B*N axis so every grid step feeds the MXU a (tm, K) tile:
    # (B,C,H,W) -> (B,C,nH,p,nW,p) -> (B,nH,nW,C,p,p) -> (B*N, K).
    # (See TODO(synk) at top of file about folding this into the kernel.)
    xb = x.astype(jnp.bfloat16)
    patches = (
        xb.reshape(B, C, nH, p, nW, p)
        .transpose(0, 2, 4, 1, 3, 5)
        .reshape(B * N, K)
    )

    M = B * N
    if tm is None:
        tm = _choose_tm(M)
    assert tm % 8 == 0 or tm == M, "tm must be a multiple of 8 sublanes"

    w_t = proj_weight.T.astype(jnp.bfloat16)              # (K, E), VMEM-resident
    bias = proj_bias.astype(jnp.float32).reshape(1, E)    # (1, E), VMEM-resident

    out_bytes = jnp.dtype(out_dtype).itemsize
    vmem_limit = _vmem_limit_bytes(tm, K, E, out_bytes)

    y = pl.pallas_call(
        _proj_kernel,
        out_shape=jax.ShapeDtypeStruct((M, E), out_dtype),
        grid_spec=pltpu.PrefetchScalarGridSpec(
            num_scalar_prefetch=0,
            grid=(pl.cdiv(M, tm),),                         # ragged tail OK (masked)
            in_specs=[
                pl.BlockSpec((tm, K), lambda i: (i, 0)),    # patches tile
                # NOTE: if xprof shows exposed DMA on v6e at small tm, add
                # pipeline_mode=pl.Buffered(3) to this spec (measure first).
                pl.BlockSpec((K, E), lambda i: (0, 0)),     # weight, resident
                pl.BlockSpec((1, E), lambda i: (0, 0)),     # bias, resident
            ],
            out_specs=pl.BlockSpec((tm, E), lambda i: (i, 0)),
        ),
        compiler_params=pltpu.CompilerParams(
            dimension_semantics=("parallel",),
            vmem_limit_bytes=vmem_limit,
        ),
    )(patches, w_t, bias)

    y = y.reshape(B, N, E)                                  # metadata-only reshape
    cls = jnp.broadcast_to(cls_token.reshape(1, 1, E).astype(y.dtype), (B, 1, E))
    # pos_embed is never added in the reference forward(); dropout(p=0) is identity.
    return jnp.concatenate([cls, y], axis=1)


def _init_params(key, in_channels, patch_size, embed_dim):
    """Deterministic parameter init mirroring the module's _init_weights()."""
    K = in_channels * patch_size * patch_size
    k_w, k_cls = jax.random.split(key, 2)
    bound = (6.0 / (K + embed_dim)) ** 0.5                  # xavier_uniform_
    proj_weight = jax.random.uniform(
        k_w, (embed_dim, K), jnp.float32, minval=-bound, maxval=bound)
    proj_bias = jnp.zeros((embed_dim,), jnp.float32)
    cls_token = 0.02 * jax.random.truncated_normal(         # trunc_normal_(std=0.02)
        k_cls, -2.0, 2.0, (1, 1, embed_dim), jnp.float32)
    return proj_weight, proj_bias, cls_token


if __name__ == "__main__":
    # Small shapes consistent with the module: img_size=16, patch_size=2,
    # in_channels=4, embed_dim=32, batch=2  ->  N=64, K=16, M=B*N=128, grid=2.
    B, C, H, W = 2, 4, 16, 16
    patch_size = 2
    embed_dim = 32

    key = jax.random.PRNGKey(0)
    k_x, k_p = jax.random.split(key)
    x = jax.random.normal(k_x, (B, C, H, W), jnp.float32)
    proj_weight, proj_bias, cls_token = _init_params(k_p, C, patch_size, embed_dim)

    fn = jax.jit(patch_embedding, static_argnames=("patch_size", "tm", "out_dtype"))
    out = fn(x, proj_weight, proj_bias, cls_token, patch_size=patch_size)
    out = jax.block_until_ready(out)

    # Pure-JAX references.
    nH, nW = H // patch_size, W // patch_size
    N, K = nH * nW, C * patch_size * patch_size
    patches_ref = (
        x.reshape(B, C, nH, patch_size, nW, patch_size)
        .transpose(0, 2, 4, 1, 3, 5)
        .reshape(B, N, K)
    )
    cls_b = jnp.broadcast_to(cls_token, (B, 1, embed_dim))

    # (a) tight check against the bf16-operand / f32-accumulate math
    pb = patches_ref.astype(jnp.bfloat16).astype(jnp.float32)
    wb = proj_weight.T.astype(jnp.bfloat16).astype(jnp.float32)
    ref_bf16 = jnp.concatenate([cls_b, pb @ wb + proj_bias], axis=1)
    # (b) loose check against the full-f32 PyTorch semantics
    ref_f32 = jnp.concatenate([cls_b, patches_ref @ proj_weight.T + proj_bias], axis=1)

    assert out.shape == (B, N + 1, embed_dim)
    assert jnp.allclose(out[:, 0, :], cls_b[:, 0, :])
    assert jnp.allclose(out, ref_bf16, atol=1e-3, rtol=1e-3)
    assert jnp.allclose(out, ref_f32, atol=5e-2, rtol=5e-2)

    print("KERNEL_OK")
</pallas_src>

<mosaic_0001>
module attributes {stable_mosaic.version = 11 : i64} {
  func.func @_proj_kernel(%arg0: i32, %arg1: memref<64x16xbf16, #tpu.memory_space<vmem>>, %arg2: memref<16x32xbf16, #tpu.memory_space<vmem>>, %arg3: memref<1x32xf32, #tpu.memory_space<vmem>>, %arg4: memref<64x32xf32, #tpu.memory_space<vmem>>) attributes {dimension_semantics = [#tpu.dimension_semantics<parallel>], iteration_bounds = array<i64: 2>, scalar_prefetch = 0 : i64, scratch_operands = 0 : i64, tpu.core_type = #tpu.core_type<tc>, window_params = [{transform_indices = @transform_0, window_bounds = array<i64: 64, 16>}, {pipeline_mode = #tpu.pipeline_mode<synchronous>, transform_indices = @transform_1, window_bounds = array<i64: 16, 32>}, {pipeline_mode = #tpu.pipeline_mode<synchronous>, transform_indices = @transform_2, window_bounds = array<i64: 1, 32>}, {transform_indices = @transform_3, window_bounds = array<i64: 64, 32>}]} {
    %c0 = arith.constant 0 : index
    %c0_0 = arith.constant 0 : index
    %0 = vector.load %arg1[%c0, %c0_0] : memref<64x16xbf16, #tpu.memory_space<vmem>>, vector<64x16xbf16>
    %c0_1 = arith.constant 0 : index
    %c0_2 = arith.constant 0 : index
    %1 = vector.load %arg2[%c0_1, %c0_2] : memref<16x32xbf16, #tpu.memory_space<vmem>>, vector<16x32xbf16>
    %cst = arith.constant dense<0.000000e+00> : vector<64x32xf32>
    %2 = tpu.matmul %0, %1, %cst {dimension_numbers = #tpu.dot_dimension_numbers<[1], [0], [0], [1], [0, 0, 1, 1], [], []>} : vector<64x16xbf16>, vector<16x32xbf16>, vector<64x32xf32> -> vector<64x32xf32>
    %c0_3 = arith.constant 0 : index
    %c0_4 = arith.constant 0 : index
    %3 = vector.load %arg3[%c0_3, %c0_4] : memref<1x32xf32, #tpu.memory_space<vmem>>, vector<1x32xf32>
    %4 = vector.broadcast %3 : vector<1x32xf32> to vector<64x32xf32>
    %5 = arith.addf %2, %4 : vector<64x32xf32>
    %c0_5 = arith.constant 0 : index
    %c0_6 = arith.constant 0 : index
    %6 = vector.load %arg4[%c0_5, %c0_6] : memref<64x32xf32, #tpu.memory_space<vmem>>, vector<64x32xf32>
    tpu.vector_store %arg4[%c0_5, %c0_6], %5 {strides = array<i32>} : memref<64x32xf32, #tpu.memory_space<vmem>>, vector<64x32xf32>,
    return
  }
  func.func @transform_0(%arg0: i32) -> (i32, i32) {
    %c0_i32 = arith.constant 0 : i32
    %c0_i32_0 = arith.constant 0 : i32
    return %arg0, %c0_i32 : i32, i32
  }
  func.func @transform_1(%arg0: i32) -> (i32, i32) {
    %c0_i32 = arith.constant 0 : i32
    %c0_i32_0 = arith.constant 0 : i32
    %c0_i32_1 = arith.constant 0 : i32
    return %c0_i32, %c0_i32_0 : i32, i32
  }
  func.func @transform_2(%arg0: i32) -> (i32, i32) {
    %c0_i32 = arith.constant 0 : i32
    %c0_i32_0 = arith.constant 0 : i32
    %c0_i32_1 = arith.constant 0 : i32
    return %c0_i32, %c0_i32_0 : i32, i32
  }
  func.func @transform_3(%arg0: i32) -> (i32, i32) {
    %c0_i32 = arith.constant 0 : i32
    %c0_i32_0 = arith.constant 0 : i32
    return %arg0, %c0_i32 : i32, i32
  }
}

</mosaic_0001>

<llo_original>
// kernel: patch_embedding.1
$region0: #{patch_embedding.1}
  #allocation0 [shape = 'u32[]', space=smem, size = 0x4, offset = 0x4, fixed_abs, tag = 'smem constant byte address 0x4 - core index']
  #allocation1 [shape = 'u32[144,128]{1,0:T(1,128)}', space=vmem, size = 0x12000, scoped, tag = 'internal scratch']
  %s0 = inlined_call_operand.vmem [shape: bf16[128,16], index: 0, kind: input, shape index: {}]
  %s1 = inlined_call_operand.vmem [shape: bf16[16,32], index: 1, kind: input, shape index: {}]
  %s2 = inlined_call_operand.vmem [shape: f32[1,32], index: 2, kind: input, shape index: {}]
  %s3 = inlined_call_operand.vmem [shape: f32[128,32], index: 3, kind: output, shape index: {}]
  %s4 = sld [smem:[#allocation0]]
  $region45: #{patch_embedding.1} parent=0
    _
  %s6 = ssub.s32 1, %s4
  %s7 = scalar_select 0, %s6, %s4
  loop: start=0, step=1, limit=4
  $region2: #{patch_embedding.1} parent=0 // loop_pre_header
    _
  $region3: #{patch_embedding.1} parent=0 // loop_header
    %s9 = sphi 0, %s13
    %p10 = scmp.ge.s32.totalorder %s9, 4
    %s19 = sphi 0, %s21
    %s22 = sphi 0, %s19
    %s23 = sphi 0, %s22
    %s39 = sphi 0, %s23
    %s43 = sphi 0, %s43
    %s45 = sphi 0, %s43
    %s46 = sphi 0, %s45
    %s60 = sphi 0, %s46
    %s64 = sphi 0, %s64
    %s66 = sphi 0, %s64
    %s67 = sphi 0, %s66
    %s81 = sphi 0, %s67
    %s87 = sphi 0, %s89
    %s90 = sphi 0, %s87
    %s91 = sphi 0, %s90
    %s107 = sphi 0, %s91
  $region4: #{patch_embedding.1} parent=0 // loop_header_branch
    %12 = sbr.rel (%p10) target = $region8
  $region5: #{patch_embedding.1} parent=0 // loop_body
    %s14 = ssub.s32 %s9, 1
    %s15 = ssub.s32 %s9, 2
    %s16 = sadd.s32 %s9, 1
    %s17 = ssub.s32 %s9, %s16
    %p18 = scmp.eq.s32.totalorder %s17, 0
    %s20 = sadd.s32 %s19, 1
    %s21 = scalar_select %p18, %s19, %s20
    %p24 = pneg %p18
    %p25 = scmp.eq.s32.totalorder %s9, 1
    %p26 = por %p24, %p25
    %p27 = scmp.ne.s32.totalorder %s19, %s22
    %p28 = scmp.eq.s32.totalorder %s9, 0
    %p29 = por %p27, %p28
    %p30 = scmp.ne.s32.totalorder %s19, %s22
    %p31 = scmp.eq.s32.totalorder %s14, 1
    %p32 = por %p30, %p31
    %p33 = scmp.ne.s32.totalorder %s22, %s23
    %p34 = scmp.eq.s32.totalorder %s14, 0
    %p35 = por %p33, %p34
    %p36 = scmp.ne.s32.totalorder %s22, %s23
    %p37 = scmp.eq.s32.totalorder %s15, 1
    %p38 = por %p36, %p37
    %p40 = scmp.ne.s32.totalorder %s23, %s39
    %p41 = scmp.eq.s32.totalorder %s15, 0
    %p42 = por %p40, %p41
    %s44 = sadd.s32 %s43, 1
    %p47 = scmp.eq.s32.totalorder %s9, 1
    %p48 = scmp.ne.s32.totalorder %s43, %s45
    %p49 = scmp.eq.s32.totalorder %s9, 0
    %p50 = por %p48, %p49
    %p51 = scmp.ne.s32.totalorder %s43, %s45
    %p52 = scmp.eq.s32.totalorder %s14, 1
    %p53 = por %p51, %p52
    %p54 = scmp.ne.s32.totalorder %s45, %s46
    %p55 = scmp.eq.s32.totalorder %s14, 0
    %p56 = por %p54, %p55
    %p57 = scmp.ne.s32.totalorder %s45, %s46
    %p58 = scmp.eq.s32.totalorder %s15, 1
    %p59 = por %p57, %p58
    %p61 = scmp.ne.s32.totalorder %s46, %s60
    %p62 = scmp.eq.s32.totalorder %s15, 0
    %p63 = por %p61, %p62
    %s65 = sadd.s32 %s64, 1
    %p68 = scmp.eq.s32.totalorder %s9, 1
    %p69 = scmp.ne.s32.totalorder %s64, %s66
    %p70 = scmp.eq.s32.totalorder %s9, 0
    %p71 = por %p69, %p70
    %p72 = scmp.ne.s32.totalorder %s64, %s66
    %p73 = scmp.eq.s32.totalorder %s14, 1
    %p74 = por %p72, %p73
    %p75 = scmp.ne.s32.totalorder %s66, %s67
    %p76 = scmp.eq.s32.totalorder %s14, 0
    %p77 = por %p75, %p76
    %p78 = scmp.ne.s32.totalorder %s66, %s67
    %p79 = scmp.eq.s32.totalorder %s15, 1
    %p80 = por %p78, %p79
    %p82 = scmp.ne.s32.totalorder %s67, %s81
    %p83 = scmp.eq.s32.totalorder %s15, 0
    %p84 = por %p82, %p83
    %s85 = ssub.s32 %s9, %s16
    %p86 = scmp.eq.s32.totalorder %s85, 0
    %s88 = sadd.s32 %s87, 1
    %s89 = scalar_select %p86, %s87, %s88
    %p92 = pneg %p86
    %p93 = scmp.eq.s32.totalorder %s9, 1
    %p94 = por %p92, %p93
    %p95 = scmp.ne.s32.totalorder %s87, %s90
    %p96 = scmp.eq.s32.totalorder %s9, 0
    %p97 = por %p95, %p96
    %p98 = scmp.ne.s32.totalorder %s87, %s90
    %p99 = scmp.eq.s32.totalorder %s14, 1
    %p100 = por %p98, %p99
    %p101 = scmp.ne.s32.totalorder %s90, %s91
    %p102 = scmp.eq.s32.totalorder %s14, 0
    %p103 = por %p101, %p102
    %p104 = scmp.ne.s32.totalorder %s90, %s91
    %p105 = scmp.eq.s32.totalorder %s15, 1
    %p106 = por %p104, %p105
    %p108 = scmp.ne.s32.totalorder %s91, %s107
    %p109 = scmp.eq.s32.totalorder %s15, 0
    %p110 = por %p108, %p109
    %p111 = scmp.le.s32.totalorder 1, %s9
    %p112 = scmp.lt.s32.totalorder %s9, 3
    %p113 = pnand %p111, %p112
    %p114 = pneg %p113
    // Predicated region
    $region9: #{patch_embedding.1} parent=5 // pred_check
      _
    $region10: #{patch_embedding.1} parent=5 // pred_check_branch
      %116 = sbr.rel (%p113) target = $region12
    $region11: #{patch_embedding.1} parent=5 // pred_region
      %s117 = ssub.s32 %s9, 1
      // Predicated region
      $region13: #{patch_embedding.1} parent=11 // pred_check
        %p118 = pneg %p56
      $region14: #{patch_embedding.1} parent=11 // pred_check_branch
        %120 = sbr.rel (%p118) target = $region16
      $region15: #{patch_embedding.1} parent=11 // pred_region
        _
      $region16: #{patch_embedding.1} parent=11 // pred_fallthru
        _
      // Predicated region
      $region17: #{patch_embedding.1} parent=11 // pred_check
        %p121 = pneg %p77
      $region18: #{patch_embedding.1} parent=11 // pred_check_branch
        %123 = sbr.rel (%p121) target = $region20
      $region19: #{patch_embedding.1} parent=11 // pred_region
        _
      $region20: #{patch_embedding.1} parent=11 // pred_fallthru
        _
    $region12: #{patch_embedding.1} parent=5 // pred_fallthru
      _
    %p124 = scmp.lt.s32.totalorder %s9, 2
    // Predicated region
    $region21: #{patch_embedding.1} parent=5 // pred_check
      %p125 = pneg %p124
    $region22: #{patch_embedding.1} parent=5 // pred_check_branch
      %127 = sbr.rel (%p125) target = $region24
    $region23: #{patch_embedding.1} parent=5 // pred_region
      // Predicated region
      $region25: #{patch_embedding.1} parent=23 // pred_check
        %p128 = pneg %p29
      $region26: #{patch_embedding.1} parent=23 // pred_check_branch
        %130 = sbr.rel (%p128) target = $region28
      $region27: #{patch_embedding.1} parent=23 // pred_region
        %s131 = smul.u32 8, %s9
        %p132 = scmp.lt.s32.totalorder %s131, 15
        %s133 = scalar_select %p132, %s131, 15
        %s134 = smul.addr %s133, 4
        %s135 = scalar_lea.vmem %s0, %s134
        %s136 = smul.u32 8, %s9
      $region28: #{patch_embedding.1} parent=23 // pred_fallthru
        _
    $region24: #{patch_embedding.1} parent=5 // pred_fallthru
      _
    %p137 = scmp.le.s32.totalorder 1, %s9
    %p138 = scmp.lt.s32.totalorder %s9, 3
    %p139 = pnand %p137, %p138
    %p140 = pneg %p139
    // Predicated region
    $region29: #{patch_embedding.1} parent=5 // pred_check
      _
    $region30: #{patch_embedding.1} parent=5 // pred_check_branch
      %142 = sbr.rel (%p139) target = $region32
    $region31: #{patch_embedding.1} parent=5 // pred_region
      %s143 = ssub.s32 %s9, 1
      %s144 = smul.u32 8, %s14
      %p145 = scmp.lt.s32.totalorder %s144, 15
      %s146 = scalar_select %p145, %s144, 15
      %s147 = smul.addr %s146, 4
      %s148 = scalar_lea.vmem %s0, %s147
      %p149 = pneg %p35
      %p150 = pneg %p32
      %p151 = pneg %p56
      %p152 = pneg %p53
      %p153 = pneg %p77
      %p154 = pneg %p74
      %p155 = pneg %p103
      %p156 = pneg %p100
      %s157 = smul.u32 8, %s14
      %p158 = scmp.lt.s32.totalorder %s157, 15
      %s159 = scalar_select %p158, %s157, 15
      %s160 = smul.addr %s159, 8
      %s161 = scalar_lea.vmem %s3, %s160
      %s162 = smul.u32 8, %s14
      %p163 = scmp.lt.s32.totalorder %s162, 15
      %s164 = scalar_select %p163, %s162, 15
      %s165 = smul.addr %s164, 4
      %s166 = scalar_lea.vmem %s0, %s165
      %s167 = smul.u32 8, %s14
      %s168 = smul.u32 8, %s14
      %p169 = scmp.lt.s32.totalorder %s168, 15
      %s170 = scalar_select %p169, %s168, 15
      %s171 = smul.addr %s170, 8
      %s172 = scalar_lea.vmem %s3, %s171
      %s173 = smul.u32 8, %s14
      %v175 = vld [vmem:[%s166] sm:$0xf]
      %v176 = vld [vmem:[%s166 + $0x4] sm:$0xf]
      %v177 = vld [vmem:[%s166 + $0x8] sm:$0xf]
      %v178 = vld [vmem:[%s166 + $0xc] sm:$0xf]
      %v179 = vld [vmem:[%s166 + $0x10] sm:$0xf]
      %v180 = vld [vmem:[%s166 + $0x14] sm:$0xf]
      %v181 = vld [vmem:[%s166 + $0x18] sm:$0xf]
      %v182 = vld [vmem:[%s166 + $0x1c] sm:$0xf]
      %v183 = vld [vmem:[%s1] sm:$0xf]
      %v184 = vld [vmem:[%s1 + $0x4] sm:$0xf]
      %v185 = vld [vmem:[%s2] sm:$0x1]
      %v187 = vlaneseq
      %v188 = vshrl.u32 %v187, 7
      %v189 = vsub.s32 0, %v188
      %v190 = vrot.slane %v185, %v189
      %v200 = vunpack.c.l.b16 %v175
      %v201 = vunpack.c.l.b16 %v176
      %v202 = vunpack.c.l.b16 %v177
      %v203 = vunpack.c.l.b16 %v178
      %v204 = vunpack.c.l.b16 %v179
      %v205 = vunpack.c.l.b16 %v180
      %v206 = vunpack.c.l.b16 %v181
      %v207 = vunpack.c.l.b16 %v182
      %v208 = vpack.c.b16 %v201, %v200
      %v209 = vpack.c.b16 %v203, %v202
      %v210 = vpack.c.b16 %v205, %v204
      %v211 = vpack.c.b16 %v207, %v206
      %v214 = vunpack.c.l.b16 %v183
      %v215 = vunpack.c.l.b16 %v184
      %v216 = vpack.c.b16 %v215, %v214
      %vm218 = vcmask 130048
      %v220 = vsel %vm218, %v208, 0
      %v223 = vsel %vm218, %v209, 0
      %v226 = vsel %vm218, %v210, 0
      %v229 = vsel %vm218, %v211, 0
      %231 = vmatprep.subr.bf16.mxu0 0
      %232 = vmatpush1.bf16.msra.mxu0 %v216
      %233 = vmatprep.subr.bf16.mxu0 0
      %234 = vmatpush1.bf16.msra.mxu0 0
      %235 = vmatprep.subr.bf16.mxu0 0
      %236 = vmatpush1.bf16.msra.mxu0 0
      %237 = vmatprep.subr.bf16.mxu0 0
      %238 = vmatpush1.bf16.msra.mxu0 0
      %239 = vmatprep.subr.bf16.mxu0 0
      %240 = vmatpush1.bf16.msra.mxu0 0
      %241 = vmatprep.subr.bf16.mxu0 0
      %242 = vmatpush1.bf16.msra.mxu0 0
      %243 = vmatprep.subr.bf16.mxu0 0
      %244 = vmatpush1.bf16.msra.mxu0 0
      %245 = vmatprep.subr.bf16.mxu0 0
      %246 = vmatpush1.bf16.msra.mxu0 0
      %247 = vmatprep.subr.bf16.mxu0 0
      %248 = vmatpush1.bf16.msra.mxu0 0
      %249 = vmatprep.subr.bf16.mxu0 0
      %250 = vmatpush1.bf16.msra.mxu0 0
      %251 = vmatprep.subr.bf16.mxu0 0
      %252 = vmatpush1.bf16.msra.mxu0 0
      %253 = vmatprep.subr.bf16.mxu0 0
      %254 = vmatpush1.bf16.msra.mxu0 0
      %255 = vmatprep.subr.bf16.mxu0 0
      %256 = vmatpush1.bf16.msra.mxu0 0
      %257 = vmatprep.subr.bf16.mxu0 0
      %258 = vmatpush1.bf16.msra.mxu0 0
      %259 = vmatprep.subr.bf16.mxu0 0
      %260 = vmatpush1.bf16.msra.mxu0 0
      %261 = vmatprep.subr.bf16.mxu0 0
      %262 = vmatpush1.bf16.msra.mxu0 0
      %263 = vmatprep.mubr.bf16.mxu0 0
      %264 = vmatmul.mubr.bf16.gmra.mrb[0].mxu0 %v220
      %v265 = vpop.f32.mrb[0].mxu0
      %v266 = vadd.f32 %v190, %v265
      %v267 = vpop.f32.mrb[0].mxu0
      %v268 = vpop.f32.mrb[0].mxu0
      %v269 = vadd.f32 %v190, %v268
      %v270 = vpop.f32.mrb[0].mxu0
      %271 = vmatprep.mubr.bf16.mxu0 0
      %272 = vmatmul.mubr.bf16.gmra.mrb[0].mxu0 %v223
      %v273 = vpop.f32.mrb[0].mxu0
      %v274 = vadd.f32 %v190, %v273
      %v275 = vpop.f32.mrb[0].mxu0
      %v276 = vpop.f32.mrb[0].mxu0
      %v277 = vadd.f32 %v190, %v276
      %v278 = vpop.f32.mrb[0].mxu0
      %279 = vmatprep.mubr.bf16.mxu0 0
      %280 = vmatmul.mubr.bf16.gmra.mrb[0].mxu0 %v226
      %v281 = vpop.f32.mrb[0].mxu0
      %v282 = vadd.f32 %v190, %v281
      %v283 = vpop.f32.mrb[0].mxu0
      %v284 = vpop.f32.mrb[0].mxu0
      %v285 = vadd.f32 %v190, %v284
      %v286 = vpop.f32.mrb[0].mxu0
      %287 = vmatprep.mubr.bf16.mxu0 0
      %288 = vmatmul.mubr.bf16.gmra.mrb[0].mxu0 %v229
      %v289 = vpop.f32.mrb[0].mxu0
      %v290 = vadd.f32 %v190, %v289
      %v291 = vpop.f32.mrb[0].mxu0
      %v292 = vpop.f32.mrb[0].mxu0
      %v293 = vadd.f32 %v190, %v292
      %v294 = vpop.f32.mrb[0].mxu0
      %295 = vdwg.mxu0
      %vm296 = vcmask 261120
      %297 = vst.msk [vmem:[%s172] sm:$0xff] %vm296, %v266
      %298 = vst.msk [vmem:[%s172 + $0x8] sm:$0xff] %vm296, %v269
      %299 = vst.msk [vmem:[%s172 + $0x10] sm:$0xff] %vm296, %v274
      %300 = vst.msk [vmem:[%s172 + $0x18] sm:$0xff] %vm296, %v277
      %301 = vst.msk [vmem:[%s172 + $0x20] sm:$0xff] %vm296, %v282
      %302 = vst.msk [vmem:[%s172 + $0x28] sm:$0xff] %vm296, %v285
      %303 = vst.msk [vmem:[%s172 + $0x30] sm:$0xff] %vm296, %v290
      %304 = vst.msk [vmem:[%s172 + $0x38] sm:$0xff] %vm296, %v293
      %s305 = smul.u32 8, %s14
      %p306 = scmp.lt.s32.totalorder %s305, 15
      %s307 = scalar_select %p306, %s305, 15
      %s308 = smul.addr %s307, 8
      %s309 = scalar_lea.vmem %s3, %s308
      // Predicated region
      $region33: #{patch_embedding.1} parent=31 // pred_check
        %p310 = pneg %p100
      $region34: #{patch_embedding.1} parent=31 // pred_check_branch
        %312 = sbr.rel (%p310) target = $region36
      $region35: #{patch_embedding.1} parent=31 // pred_region
        %s313 = smul.u32 8, %s14
      $region36: #{patch_embedding.1} parent=31 // pred_fallthru
        _
    $region32: #{patch_embedding.1} parent=5 // pred_fallthru
      _
    %p314 = scmp.le.s32.totalorder 2, %s9
    // Predicated region
    $region37: #{patch_embedding.1} parent=5 // pred_check
      %p315 = pneg %p314
    $region38: #{patch_embedding.1} parent=5 // pred_check_branch
      %317 = sbr.rel (%p315) target = $region40
    $region39: #{patch_embedding.1} parent=5 // pred_region
      %s318 = ssub.s32 %s9, 2
      // Predicated region
      $region41: #{patch_embedding.1} parent=39 // pred_check
        %p319 = pneg %p106
      $region42: #{patch_embedding.1} parent=39 // pred_check_branch
        %321 = sbr.rel (%p319) target = $region44
      $region43: #{patch_embedding.1} parent=39 // pred_region
        %s322 = smul.u32 8, %s15
        %p323 = scmp.lt.s32.totalorder %s322, 15
        %s324 = scalar_select %p323, %s322, 15
        %s325 = smul.addr %s324, 8
        %s326 = scalar_lea.vmem %s3, %s325
      $region44: #{patch_embedding.1} parent=39 // pred_fallthru
        _
    $region40: #{patch_embedding.1} parent=5 // pred_fallthru
      _
  $region6: #{patch_embedding.1} parent=0 // loop_footer
    %s13 = sadd.s32 1, %s9
  $region7: #{patch_embedding.1} parent=0 // loop_footer_branch
    %8 = sbr.rel target = $region3
  $region8: #{patch_embedding.1} parent=0 // loop_exit
    _

</llo_original>
